<compile_context>
chip_gen: v7x
topology: tpu7x:2x2x1
jax: 0.10.0
libtpu: 0.0.40
codegen_flags: <defaults>
</compile_context>

<pallas_src>
import functools

import jax
import jax.numpy as jnp
from jax import lax
from jax.experimental import pallas as pl
from jax.experimental.pallas import tpu as pltpu

_NEG = -1e30  # finite sentinel for masked logits (avoids inf-inf -> NaN)


def _round_up(x, m):
    return (x + m - 1) // m * m


def _vmem_capacity_bytes():
    try:
        return int(pltpu.get_tpu_info().vmem_capacity_bytes)
    except Exception:
        return 64 * 1024 * 1024  # conservative default (v7x per-core VMEM)


def _choose_tile(B, D, itemsize, vmem_cap):
    """Largest tile in {128, 256, 512} that fits the VMEM budget w/o waste."""
    budget = vmem_cap // 3  # double-buffered row+col windows get ~1/3 of VMEM
    tile = 128              # floor: never sub-128 (lane-padded MXU tiles)
    for cand in (256, 512):
        if 4 * cand * D * itemsize > budget:     # 2 refs x 2 buffers
            break
        bp = _round_up(B, cand)
        if 4 * (bp - B) > bp:                    # > 25% zero-padding waste
            break
        tile = cand
    return tile


def _ntxent_kernel(row_ref, col_ref, out_ref, m_scr, l_scr, *,
                   inv_temp, valid_b, half_tiles, tile, prescale):
    i = pl.program_id(0)                  # row tile over padded [queries; keys]
    j = pl.program_id(1)                  # col tile over padded [queries; keys]
    last_j = pl.num_programs(1) - 1

    @pl.when(j == 0)
    def _():
        m_scr[...] = jnp.full_like(m_scr, _NEG)
        l_scr[...] = jnp.zeros_like(l_scr)

    row = row_ref[...]
    if prescale:
        # f32 inputs: fold 1/temperature into the (tile, D) row operand
        # (tile*D multiply) instead of scaling the (tile, tile) similarity.
        row = row * inv_temp

    # Similarity tile on the MXU: contract on D of both operands (transpose-
    # free lowering), f32 accumulation regardless of input dtype.
    s = lax.dot_general(row, col_ref[...], (((1,), (1,)), ((), ())),
                        preferred_element_type=jnp.float32)
    if not prescale:
        # bf16 feed: scale the f32 logits so bf16 rounding never touches them.
        s = s * inv_temp

    # Zero-padding mask: only emitted if padded (static) and only executed on
    # the last column tile of each half (runtime gate).
    if valid_b % tile != 0:
        def _mask_pad(x):
            col_iota = lax.broadcasted_iota(jnp.int32, (tile, tile), 1)
            return jnp.where(col_iota >= (valid_b % tile), _NEG, x)

        s = lax.cond((j % half_tiles) == half_tiles - 1,
                     _mask_pad, lambda x: x, s)

    # Self-similarity diagonal: with square tiles it only intersects when the
    # row tile index equals the column tile index.
    def _mask_diag(x):
        r = lax.broadcasted_iota(jnp.int32, (tile, tile), 0)
        c = lax.broadcasted_iota(jnp.int32, (tile, tile), 1)
        return jnp.where(r == c, _NEG, x)

    s = lax.cond(i == j, _mask_diag, lambda x: x, s)

    # Streaming logsumexp update.
    m_prev = m_scr[...]
    m_new = jnp.maximum(m_prev, jnp.max(s, axis=-1, keepdims=True))
    alpha = jnp.exp(m_prev - m_new)
    p = jnp.exp(s - m_new)
    l_scr[...] = alpha * l_scr[...] + jnp.sum(p, axis=-1, keepdims=True)
    m_scr[...] = m_new

    @pl.when(j == last_j)
    def _():
        out_ref[...] = m_scr[...] + jnp.log(l_scr[...])


def ntxent_loss(queries: jax.Array, keys: jax.Array, temperature: float = 0.1,
                *, block: int | None = None,
                similarity_dtype=None) -> jax.Array:
    """NT-Xent loss. queries, keys: (B, D). Returns scalar f32.

    block: optional explicit tile size (multiple of 8); default is chosen from
      the device's VMEM capacity.
    similarity_dtype: optional dtype for the similarity matmul feed (e.g.
      jnp.bfloat16 to halve HBM traffic for f32 inputs); default = input dtype.
    """
    assert queries.shape == keys.shape and queries.ndim == 2
    B, D = queries.shape
    n = 2 * B
    inv_temp = 1.0 / float(temperature)

    sim_dtype = jnp.dtype(similarity_dtype) if similarity_dtype is not None \
        else jnp.dtype(queries.dtype)
    itemsize = sim_dtype.itemsize
    vmem_cap = _vmem_capacity_bytes()

    if block is None:
        tile = _choose_tile(B, D, itemsize, vmem_cap)
    else:
        assert block % 8 == 0
        tile = block
    Bp = _round_up(B, tile)
    half_tiles = Bp // tile

    q = queries.astype(sim_dtype)
    k = keys.astype(sim_dtype)
    if Bp != B:
        pad = ((0, Bp - B), (0, 0))
        q = jnp.pad(q, pad)
        k = jnp.pad(k, pad)
    projs = jnp.concatenate([q, k], axis=0)          # (2*Bp, D), one-time O(n*D)

    prescale = (sim_dtype == jnp.float32)

    kernel = functools.partial(
        _ntxent_kernel, inv_temp=inv_temp, valid_b=B,
        half_tiles=half_tiles, tile=tile, prescale=prescale)

    # VMEM budget derived from actual buffer sizes (generation aware).
    win = tile * D * itemsize
    need = 4 * win + 2 * tile * 4 + 2 * tile * 4   # 2 refs x 2 bufs + out + scratch
    vmem_limit = min(int(0.7 * vmem_cap), max(2 * need, 32 * 1024 * 1024))
    vmem_limit = max(vmem_limit, need + (4 << 20))

    grid = (2 * half_tiles, 2 * half_tiles)
    lse = pl.pallas_call(
        kernel,
        out_shape=jax.ShapeDtypeStruct((2 * Bp, 1), jnp.float32),
        grid_spec=pltpu.PrefetchScalarGridSpec(
            num_scalar_prefetch=0,
            grid=grid,
            in_specs=[
                pl.BlockSpec((tile, D), lambda i, j: (i, 0)),   # row tile
                pl.BlockSpec((tile, D), lambda i, j: (j, 0)),   # column tile
            ],
            out_specs=pl.BlockSpec((tile, 1), lambda i, j: (i, 0)),
            scratch_shapes=[pltpu.VMEM((tile, 1), jnp.float32),   # running max
                            pltpu.VMEM((tile, 1), jnp.float32)],  # running sum
        ),
        compiler_params=pltpu.CompilerParams(
            dimension_semantics=("parallel", "arbitrary"),
            vmem_limit_bytes=vmem_limit,
        ),
    )(projs, projs)

    lse = lse[:, 0]
    # Positive logit dot(q_i, k_i)/T in f32 (tiny, O(B*D)); same value is the
    # label column for both the query row i and the key row i.
    pos = jnp.sum(queries.astype(jnp.float32) * keys.astype(jnp.float32),
                  axis=-1) * inv_temp
    total = jnp.sum(lse[:B]) + jnp.sum(lse[Bp:Bp + B]) - 2.0 * jnp.sum(pos)
    return total / jnp.float32(n)


def _ntxent_reference(queries, keys, temperature=0.1):
    # Pure-JAX reference mirroring the PyTorch module exactly.
    b = queries.shape[0]
    n = 2 * b
    projs = jnp.concatenate([queries, keys], axis=0).astype(jnp.float32)
    logits = jnp.matmul(projs, projs.T, precision=jax.lax.Precision.HIGHEST)
    mask = ~jnp.eye(n, dtype=bool)
    logits = logits[mask].reshape(n, n - 1) / temperature
    labels = jnp.concatenate([jnp.arange(b) + b - 1, jnp.arange(b)])
    lse = jax.scipy.special.logsumexp(logits, axis=-1)
    picked = logits[jnp.arange(n), labels]
    return jnp.sum(lse - picked) / n


def _check(q, k, temperature=0.1, rtol=1e-4, atol=1e-4, **kwargs):
    loss = ntxent_loss(q, k, temperature=temperature, **kwargs)
    loss = jax.block_until_ready(loss)
    ref = _ntxent_reference(q.astype(jnp.float32), k.astype(jnp.float32),
                            temperature=temperature)
    assert jnp.allclose(loss, ref, rtol=rtol, atol=atol), (loss, ref)


if __name__ == "__main__":
    key = jax.random.PRNGKey(0)
    ks = jax.random.split(key, 8)

    # 1) Tiny shape implied by the module usage: B=4, D=32, f32.
    q0 = jax.random.normal(ks[0], (4, 32), dtype=jnp.float32)
    c0 = jax.random.normal(ks[1], (4, 32), dtype=jnp.float32)
    _check(q0, c0)

    # 2) B not a multiple of the tile (padding-mask path), D=64.
    q1 = jax.random.normal(ks[2], (13, 64), dtype=jnp.float32)
    c1 = jax.random.normal(ks[3], (13, 64), dtype=jnp.float32)
    _check(q1, c1)

    # 3) Multi-tile grid within each half (half_tiles=2) + padding, explicit block.
    q2 = jax.random.normal(ks[4], (200, 32), dtype=jnp.float32)
    c2 = jax.random.normal(ks[5], (200, 32), dtype=jnp.float32)
    _check(q2, c2, block=128)

    # 4) bf16 inputs (bf16 MXU feed, f32 accumulation), normalized features.
    q3 = jax.random.normal(ks[6], (40, 128), dtype=jnp.float32)
    c3 = jax.random.normal(ks[7], (40, 128), dtype=jnp.float32)
    q3 = q3 / jnp.linalg.norm(q3, axis=-1, keepdims=True)
    c3 = c3 / jnp.linalg.norm(c3, axis=-1, keepdims=True)
    _check(q3.astype(jnp.bfloat16), c3.astype(jnp.bfloat16),
           rtol=5e-4, atol=5e-4)

    # 5) Opt-in bf16 similarity feed for f32 inputs (halved HBM streaming).
    _check(q3, c3, similarity_dtype=jnp.bfloat16, rtol=2e-2, atol=2e-2)

    print("KERNEL_OK")
</pallas_src>

<mosaic_0001>
module attributes {stable_mosaic.version = 11 : i64} {
  func.func @_ntxent_kernel(%arg0: i32, %arg1: i32, %arg2: memref<128x32xf32, #tpu.memory_space<vmem>>, %arg3: memref<128x32xf32, #tpu.memory_space<vmem>>, %arg4: memref<128x1xf32, #tpu.memory_space<vmem>>, %arg5: memref<128x1xf32, #tpu.memory_space<vmem>>, %arg6: memref<128x1xf32, #tpu.memory_space<vmem>>) attributes {dimension_semantics = [#tpu.dimension_semantics<parallel>, #tpu.dimension_semantics<arbitrary>], iteration_bounds = array<i64: 2, 2>, scalar_prefetch = 0 : i64, scratch_operands = 2 : i64, tpu.core_type = #tpu.core_type<tc>, window_params = [{transform_indices = @transform_0, window_bounds = array<i64: 128, 32>}, {transform_indices = @transform_1, window_bounds = array<i64: 128, 32>}, {transform_indices = @transform_2, window_bounds = array<i64: 128, 1>}]} {
    %c0_i32 = arith.constant 0 : i32
    %0 = arith.cmpi eq, %arg1, %c0_i32 : i32
    %1 = arith.extui %0 : i1 to i32
    %c0_i32_0 = arith.constant 0 : i32
    %2 = arith.cmpi ne, %1, %c0_i32_0 : i32
    scf.if %2 {
      %cst_25 = arith.constant -1.000000e+30 : f32
      %45 = vector.broadcast %cst_25 : f32 to vector<128x1xf32>
      %c0_26 = arith.constant 0 : index
      %c0_27 = arith.constant 0 : index
      %46 = vector.load %arg5[%c0_26, %c0_27] : memref<128x1xf32, #tpu.memory_space<vmem>>, vector<128x1xf32>
      tpu.vector_store %arg5[%c0_26, %c0_27], %45 {strides = array<i32>} : memref<128x1xf32, #tpu.memory_space<vmem>>, vector<128x1xf32>,
      %cst_28 = arith.constant 0.000000e+00 : f32
      %47 = vector.broadcast %cst_28 : f32 to vector<128x1xf32>
      %c0_29 = arith.constant 0 : index
      %c0_30 = arith.constant 0 : index
      %48 = vector.load %arg6[%c0_29, %c0_30] : memref<128x1xf32, #tpu.memory_space<vmem>>, vector<128x1xf32>
      tpu.vector_store %arg6[%c0_29, %c0_30], %47 {strides = array<i32>} : memref<128x1xf32, #tpu.memory_space<vmem>>, vector<128x1xf32>,
    } else {
    }
    %c0 = arith.constant 0 : index
    %c0_1 = arith.constant 0 : index
    %3 = vector.load %arg2[%c0, %c0_1] : memref<128x32xf32, #tpu.memory_space<vmem>>, vector<128x32xf32>
    %cst = arith.constant 1.000000e+01 : f32
    %4 = vector.broadcast %cst : f32 to vector<128x32xf32>
    %5 = arith.mulf %3, %4 : vector<128x32xf32>
    %c0_2 = arith.constant 0 : index
    %c0_3 = arith.constant 0 : index
    %6 = vector.load %arg3[%c0_2, %c0_3] : memref<128x32xf32, #tpu.memory_space<vmem>>, vector<128x32xf32>
    %cst_4 = arith.constant dense<0.000000e+00> : vector<128x128xf32>
    %7 = tpu.matmul %5, %6, %cst_4 {dimension_numbers = #tpu.dot_dimension_numbers<[1], [1], [0], [0], [0, 0, 1, 0], [], []>} : vector<128x32xf32>, vector<128x32xf32>, vector<128x128xf32> -> vector<128x128xf32>
    %c1_i32 = arith.constant 1 : i32
    %c0_i32_5 = arith.constant 0 : i32
    %8 = arith.cmpi eq, %c1_i32, %c0_i32_5 : i32
    %c1_i32_6 = arith.constant 1 : i32
    %9 = arith.select %8, %c1_i32_6, %c1_i32 : i32
    %10 = arith.remsi %arg1, %9 : i32
    %c0_i32_7 = arith.constant 0 : i32
    %11 = arith.cmpi ne, %10, %c0_i32_7 : i32
    %c0_i32_8 = arith.constant 0 : i32
    %12 = arith.cmpi slt, %10, %c0_i32_8 : i32
    %c0_i32_9 = arith.constant 0 : i32
    %13 = arith.cmpi slt, %9, %c0_i32_9 : i32
    %14 = arith.xori %12, %13 : i1
    %15 = arith.andi %14, %11 : i1
    %16 = arith.addi %10, %9 : i32
    %17 = arith.select %15, %16, %10 : i32
    %c0_i32_10 = arith.constant 0 : i32
    %18 = arith.cmpi eq, %17, %c0_i32_10 : i32
    %19 = arith.extui %18 : i1 to i32
    %c0_i32_11 = arith.constant 0 : i32
    %20 = arith.cmpi ne, %19, %c0_i32_11 : i32
    %21 = scf.if %20 -> (vector<128x128xf32>) {
      %45 = tpu.iota {dimensions = array<i32: 1>} : vector<128x128xi32>
      %c4_i32 = arith.constant 4 : i32
      %46 = vector.broadcast %c4_i32 : i32 to vector<128x128xi32>
      %47 = arith.cmpi sge, %45, %46 : vector<128x128xi32>
      %cst_25 = arith.constant -1.000000e+30 : f32
      %48 = vector.broadcast %cst_25 : f32 to vector<128x128xf32>
      %49 = arith.select %47, %48, %7 : vector<128x128xi1>, vector<128x128xf32>
      scf.yield %49 : vector<128x128xf32>
    } else {
      scf.yield %7 : vector<128x128xf32>
    }
    %22 = arith.cmpi eq, %arg0, %arg1 : i32
    %23 = arith.extui %22 : i1 to i32
    %c0_i32_12 = arith.constant 0 : i32
    %24 = arith.cmpi ne, %23, %c0_i32_12 : i32
    %25 = scf.if %24 -> (vector<128x128xf32>) {
      %45 = tpu.iota {dimensions = array<i32: 0>} : vector<128x128xi32>
      %46 = tpu.iota {dimensions = array<i32: 1>} : vector<128x128xi32>
      %47 = arith.cmpi eq, %45, %46 : vector<128x128xi32>
      %cst_25 = arith.constant -1.000000e+30 : f32
      %48 = vector.broadcast %cst_25 : f32 to vector<128x128xf32>
      %49 = arith.select %47, %48, %21 : vector<128x128xi1>, vector<128x128xf32>
      scf.yield %49 : vector<128x128xf32>
    } else {
      scf.yield %21 : vector<128x128xf32>
    }
    %c0_13 = arith.constant 0 : index
    %c0_14 = arith.constant 0 : index
    %26 = vector.load %arg5[%c0_13, %c0_14] : memref<128x1xf32, #tpu.memory_space<vmem>>, vector<128x1xf32>
    %cst_15 = arith.constant dense<0xFF800000> : vector<128xf32>
    %27 = vector.multi_reduction <maximumf>, %25, %cst_15 [1] : vector<128x128xf32> to vector<128xf32>
    %28 = vector.shape_cast %27 : vector<128xf32> to vector<128x1xf32>
    %29 = arith.maximumf %26, %28 : vector<128x1xf32>
    %30 = arith.subf %26, %29 : vector<128x1xf32>
    %31 = math.exp %30 : vector<128x1xf32>
    %32 = vector.broadcast %29 : vector<128x1xf32> to vector<128x128xf32>
    %33 = arith.subf %25, %32 : vector<128x128xf32>
    %34 = math.exp %33 : vector<128x128xf32>
    %c0_16 = arith.constant 0 : index
    %c0_17 = arith.constant 0 : index
    %35 = vector.load %arg6[%c0_16, %c0_17] : memref<128x1xf32, #tpu.memory_space<vmem>>, vector<128x1xf32>
    %36 = arith.mulf %31, %35 : vector<128x1xf32>
    %cst_18 = arith.constant dense<0.000000e+00> : vector<128xf32>
    %37 = vector.multi_reduction <add>, %34, %cst_18 [1] : vector<128x128xf32> to vector<128xf32>
    %38 = vector.shape_cast %37 : vector<128xf32> to vector<128x1xf32>
    %39 = arith.addf %36, %38 : vector<128x1xf32>
    %c0_19 = arith.constant 0 : index
    %c0_20 = arith.constant 0 : index
    %40 = vector.load %arg6[%c0_19, %c0_20] : memref<128x1xf32, #tpu.memory_space<vmem>>, vector<128x1xf32>
    tpu.vector_store %arg6[%c0_19, %c0_20], %39 {strides = array<i32>} : memref<128x1xf32, #tpu.memory_space<vmem>>, vector<128x1xf32>,
    %c0_21 = arith.constant 0 : index
    %c0_22 = arith.constant 0 : index
    %41 = vector.load %arg5[%c0_21, %c0_22] : memref<128x1xf32, #tpu.memory_space<vmem>>, vector<128x1xf32>
    tpu.vector_store %arg5[%c0_21, %c0_22], %29 {strides = array<i32>} : memref<128x1xf32, #tpu.memory_space<vmem>>, vector<128x1xf32>,
    %c1_i32_23 = arith.constant 1 : i32
    %42 = arith.cmpi eq, %arg1, %c1_i32_23 : i32
    %43 = arith.extui %42 : i1 to i32
    %c0_i32_24 = arith.constant 0 : i32
    %44 = arith.cmpi ne, %43, %c0_i32_24 : i32
    scf.if %44 {
      %c0_25 = arith.constant 0 : index
      %c0_26 = arith.constant 0 : index
      %45 = vector.load %arg5[%c0_25, %c0_26] : memref<128x1xf32, #tpu.memory_space<vmem>>, vector<128x1xf32>
      %c0_27 = arith.constant 0 : index
      %c0_28 = arith.constant 0 : index
      %46 = vector.load %arg6[%c0_27, %c0_28] : memref<128x1xf32, #tpu.memory_space<vmem>>, vector<128x1xf32>
      %47 = math.log %46 : vector<128x1xf32>
      %48 = arith.addf %45, %47 : vector<128x1xf32>
      %c0_29 = arith.constant 0 : index
      %c0_30 = arith.constant 0 : index
      %49 = vector.load %arg4[%c0_29, %c0_30] : memref<128x1xf32, #tpu.memory_space<vmem>>, vector<128x1xf32>
      tpu.vector_store %arg4[%c0_29, %c0_30], %48 {strides = array<i32>} : memref<128x1xf32, #tpu.memory_space<vmem>>, vector<128x1xf32>,
    } else {
    }
    return
  }
  func.func @transform_0(%arg0: i32, %arg1: i32) -> (i32, i32) {
    %c0_i32 = arith.constant 0 : i32
    %c0_i32_0 = arith.constant 0 : i32
    return %arg0, %c0_i32 : i32, i32
  }
  func.func @transform_1(%arg0: i32, %arg1: i32) -> (i32, i32) {
    %c0_i32 = arith.constant 0 : i32
    %c0_i32_0 = arith.constant 0 : i32
    return %arg1, %c0_i32 : i32, i32
  }
  func.func @transform_2(%arg0: i32, %arg1: i32) -> (i32, i32) {
    %c0_i32 = arith.constant 0 : i32
    %c0_i32_0 = arith.constant 0 : i32
    return %arg0, %c0_i32 : i32, i32
  }
}

</mosaic_0001>

<llo_original>
// kernel: tpu_custom_call.1
$region0: #{tpu_custom_call.1}
  #allocation0 [shape = 'u32[]', space=smem, size = 0x4, offset = 0x4, fixed_abs, tag = 'smem constant byte address 0x4 - core index']
  #allocation1 [shape = 'u32[144,128]{1,0:T(1,128)}', space=vmem, size = 0x12000, scoped, tag = 'internal scratch']
  #allocation2 [shape = 'f32[128,1]{1,0:T(8,128)}', space=vmem, size = 0x10000, scoped, tag = 'scratch operand']
  #allocation3 [shape = 'f32[128,1]{1,0:T(8,128)}', space=vmem, size = 0x10000, scoped, tag = 'scratch operand']
  %s0 = inlined_call_operand.vmem [shape: f32[256,32], index: 0, kind: input, shape index: {}]
  %s1 = inlined_call_operand.vmem [shape: f32[256,32], index: 1, kind: input, shape index: {}]
  %s2 = inlined_call_operand.vmem [shape: f32[256,1], index: 2, kind: output, shape index: {}]
  %s3 = sld [smem:[#allocation0]]
  $region57: #{tpu_custom_call.1} parent=0
    _
  %s5 = ssub.s32 1, %s3
  %s6 = scalar_select 0, %s5, %s3
  loop: start=0, step=1, limit=6
  $region2: #{tpu_custom_call.1} parent=0 // loop_pre_header
    _
  $region3: #{tpu_custom_call.1} parent=0 // loop_header
    %s8 = sphi 0, %s12
    %p9 = scmp.ge.s32.totalorder %s8, 6
    %s15 = sphi 0, %s27
    %s16 = sphi 0, %s23
    %s17 = sphi 0, %s15
    %s18 = sphi 0, %s16
    %s19 = sphi 0, %s17
    %s20 = sphi 0, %s18
    %s30 = sphi 0, %s32
    %s33 = sphi 0, %s30
    %s34 = sphi 0, %s33
    %s50 = sphi 0, %s34
    %s56 = sphi 0, %s58
    %s59 = sphi 0, %s56
    %s60 = sphi 0, %s59
    %s76 = sphi 0, %s60
    %s82 = sphi 0, %s84
    %s85 = sphi 0, %s82
    %s86 = sphi 0, %s85
    %s102 = sphi 0, %s86
  $region4: #{tpu_custom_call.1} parent=0 // loop_header_branch
    %11 = sbr.rel (%p9) target = $region8
  $region5: #{tpu_custom_call.1} parent=0 // loop_body
    %s13 = ssub.s32 %s8, 1
    %s14 = ssub.s32 %s8, 2
    %s21 = sadd.s32 1, %s16
    %p22 = scmp.ge.s32.totalorder %s21, 2
    %s23 = scalar_select %p22, 0, %s21
    %s24 = sadd.s32 1, %s15
    %s25 = scalar_select %p22, %s24, %s15
    %p26 = scmp.ge.s32.totalorder %s25, 2
    %s27 = scalar_select %p26, 0, %s25
    %s28 = ssub.s32 %s15, %s27
    %p29 = scmp.eq.s32.totalorder %s28, 0
    %s31 = sadd.s32 %s30, 1
    %s32 = scalar_select %p29, %s30, %s31
    %p35 = pneg %p29
    %p36 = scmp.eq.s32.totalorder %s8, 3
    %p37 = por %p35, %p36
    %p38 = scmp.ne.s32.totalorder %s30, %s33
    %p39 = scmp.eq.s32.totalorder %s8, 0
    %p40 = por %p38, %p39
    %p41 = scmp.ne.s32.totalorder %s30, %s33
    %p42 = scmp.eq.s32.totalorder %s13, 3
    %p43 = por %p41, %p42
    %p44 = scmp.ne.s32.totalorder %s33, %s34
    %p45 = scmp.eq.s32.totalorder %s13, 0
    %p46 = por %p44, %p45
    %p47 = scmp.ne.s32.totalorder %s33, %s34
    %p48 = scmp.eq.s32.totalorder %s14, 3
    %p49 = por %p47, %p48
    %p51 = scmp.ne.s32.totalorder %s34, %s50
    %p52 = scmp.eq.s32.totalorder %s14, 0
    %p53 = por %p51, %p52
    %s54 = ssub.s32 %s16, %s23
    %p55 = scmp.eq.s32.totalorder %s54, 0
    %s57 = sadd.s32 %s56, 1
    %s58 = scalar_select %p55, %s56, %s57
    %p61 = pneg %p55
    %p62 = scmp.eq.s32.totalorder %s8, 3
    %p63 = por %p61, %p62
    %p64 = scmp.ne.s32.totalorder %s56, %s59
    %p65 = scmp.eq.s32.totalorder %s8, 0
    %p66 = por %p64, %p65
    %p67 = scmp.ne.s32.totalorder %s56, %s59
    %p68 = scmp.eq.s32.totalorder %s13, 3
    %p69 = por %p67, %p68
    %p70 = scmp.ne.s32.totalorder %s59, %s60
    %p71 = scmp.eq.s32.totalorder %s13, 0
    %p72 = por %p70, %p71
    %p73 = scmp.ne.s32.totalorder %s59, %s60
    %p74 = scmp.eq.s32.totalorder %s14, 3
    %p75 = por %p73, %p74
    %p77 = scmp.ne.s32.totalorder %s60, %s76
    %p78 = scmp.eq.s32.totalorder %s14, 0
    %p79 = por %p77, %p78
    %s80 = ssub.s32 %s15, %s27
    %p81 = scmp.eq.s32.totalorder %s80, 0
    %s83 = sadd.s32 %s82, 1
    %s84 = scalar_select %p81, %s82, %s83
    %p87 = pneg %p81
    %p88 = scmp.eq.s32.totalorder %s8, 3
    %p89 = por %p87, %p88
    %p90 = scmp.ne.s32.totalorder %s82, %s85
    %p91 = scmp.eq.s32.totalorder %s8, 0
    %p92 = por %p90, %p91
    %p93 = scmp.ne.s32.totalorder %s82, %s85
    %p94 = scmp.eq.s32.totalorder %s13, 3
    %p95 = por %p93, %p94
    %p96 = scmp.ne.s32.totalorder %s85, %s86
    %p97 = scmp.eq.s32.totalorder %s13, 0
    %p98 = por %p96, %p97
    %p99 = scmp.ne.s32.totalorder %s85, %s86
    %p100 = scmp.eq.s32.totalorder %s14, 3
    %p101 = por %p99, %p100
    %p103 = scmp.ne.s32.totalorder %s86, %s102
    %p104 = scmp.eq.s32.totalorder %s14, 0
    %p105 = por %p103, %p104
    %p106 = scmp.le.s32.totalorder 1, %s8
    %p107 = scmp.lt.s32.totalorder %s8, 5
    %p108 = pnand %p106, %p107
    %p109 = pneg %p108
    // Predicated region
    $region9: #{tpu_custom_call.1} parent=5 // pred_check
      _
    $region10: #{tpu_custom_call.1} parent=5 // pred_check_branch
      %111 = sbr.rel (%p108) target = $region12
    $region11: #{tpu_custom_call.1} parent=5 // pred_region
      %s112 = ssub.s32 %s8, 1
    $region12: #{tpu_custom_call.1} parent=5 // pred_fallthru
      _
    %p113 = scmp.lt.s32.totalorder %s8, 4
    // Predicated region
    $region13: #{tpu_custom_call.1} parent=5 // pred_check
      %p114 = pneg %p113
    $region14: #{tpu_custom_call.1} parent=5 // pred_check_branch
      %116 = sbr.rel (%p114) target = $region16
    $region15: #{tpu_custom_call.1} parent=5 // pred_region
      // Predicated region
      $region17: #{tpu_custom_call.1} parent=15 // pred_check
        %p117 = pneg %p40
      $region18: #{tpu_custom_call.1} parent=15 // pred_check_branch
        %119 = sbr.rel (%p117) target = $region20
      $region19: #{tpu_custom_call.1} parent=15 // pred_region
        %s120 = smul.u32 16, %s15
        %p121 = scmp.lt.s32.totalorder %s120, 31
        %s122 = scalar_select %p121, %s120, 31
        %s123 = smul.addr %s122, 8
        %s124 = scalar_lea.vmem %s0, %s123
        %s125 = smul.u32 16, %s15
      $region20: #{tpu_custom_call.1} parent=15 // pred_fallthru
        _
      // Predicated region
      $region21: #{tpu_custom_call.1} parent=15 // pred_check
        %p126 = pneg %p66
      $region22: #{tpu_custom_call.1} parent=15 // pred_check_branch
        %128 = sbr.rel (%p126) target = $region24
      $region23: #{tpu_custom_call.1} parent=15 // pred_region
        %s129 = smul.u32 16, %s16
        %p130 = scmp.lt.s32.totalorder %s129, 31
        %s131 = scalar_select %p130, %s129, 31
        %s132 = smul.addr %s131, 8
        %s133 = scalar_lea.vmem %s1, %s132
        %s134 = smul.u32 16, %s16
      $region24: #{tpu_custom_call.1} parent=15 // pred_fallthru
        _
    $region16: #{tpu_custom_call.1} parent=5 // pred_fallthru
      _
    %p135 = scmp.le.s32.totalorder 1, %s8
    %p136 = scmp.lt.s32.totalorder %s8, 5
    %p137 = pnand %p135, %p136
    %p138 = pneg %p137
    // Predicated region
    $region25: #{tpu_custom_call.1} parent=5 // pred_check
      _
    $region26: #{tpu_custom_call.1} parent=5 // pred_check_branch
      %140 = sbr.rel (%p137) target = $region28
    $region27: #{tpu_custom_call.1} parent=5 // pred_region
      %s141 = ssub.s32 %s8, 1
      %s142 = smul.u32 16, %s17
      %p143 = scmp.lt.s32.totalorder %s142, 31
      %s144 = scalar_select %p143, %s142, 31
      %s145 = smul.addr %s144, 8
      %s146 = scalar_lea.vmem %s0, %s145
      %p147 = pneg %p46
      %p148 = pneg %p43
      %s149 = smul.u32 16, %s18
      %p150 = scmp.lt.s32.totalorder %s149, 31
      %s151 = scalar_select %p150, %s149, 31
      %s152 = smul.addr %s151, 8
      %s153 = scalar_lea.vmem %s1, %s152
      %p154 = pneg %p72
      %p155 = pneg %p69
      %p156 = pneg %p98
      %p157 = pneg %p95
      %s158 = smul.u32 16, %s17
      %p159 = scmp.lt.s32.totalorder %s158, 31
      %s160 = scalar_select %p159, %s158, 31
      %s161 = smul.addr %s160, 8
      %s162 = scalar_lea.vmem %s2, %s161
      %s163 = smul.u32 16, %s17
      %p164 = scmp.lt.s32.totalorder %s163, 31
      %s165 = scalar_select %p164, %s163, 31
      %s166 = smul.addr %s165, 8
      %s167 = scalar_lea.vmem %s0, %s166
      %s168 = smul.u32 16, %s17
      %s169 = smul.u32 16, %s18
      %p170 = scmp.lt.s32.totalorder %s169, 31
      %s171 = scalar_select %p170, %s169, 31
      %s172 = smul.addr %s171, 8
      %s173 = scalar_lea.vmem %s1, %s172
      %s174 = smul.u32 16, %s18
      %s175 = smul.u32 16, %s17
      %p176 = scmp.lt.s32.totalorder %s175, 31
      %s177 = scalar_select %p176, %s175, 31
      %s178 = smul.addr %s177, 8
      %s179 = scalar_lea.vmem %s2, %s178
      %s180 = smul.u32 16, %s17
      %p181 = scmp.eq.s32.totalorder %s18, 0
      // Predicated region
      $region29: #{tpu_custom_call.1} parent=27 // pred_check
        %p182 = pneg %p181
      $region30: #{tpu_custom_call.1} parent=27 // pred_check_branch
        %184 = sbr.rel (%p182) target = $region32
      $region31: #{tpu_custom_call.1} parent=27 // pred_region
        %vm185 = vcmask 7168
        %186 = vst.msk [vmem:[#allocation2] sm:$0xff] %vm185, -1e+30
        %187 = vst.msk [vmem:[#allocation2 + $0x8] sm:$0xff] %vm185, -1e+30
        %188 = vst.msk [vmem:[#allocation2 + $0x10] sm:$0xff] %vm185, -1e+30
        %189 = vst.msk [vmem:[#allocation2 + $0x18] sm:$0xff] %vm185, -1e+30
        %190 = vst.msk [vmem:[#allocation2 + $0x20] sm:$0xff] %vm185, -1e+30
        %191 = vst.msk [vmem:[#allocation2 + $0x28] sm:$0xff] %vm185, -1e+30
        %192 = vst.msk [vmem:[#allocation2 + $0x30] sm:$0xff] %vm185, -1e+30
        %193 = vst.msk [vmem:[#allocation2 + $0x38] sm:$0xff] %vm185, -1e+30
        %194 = vst.msk [vmem:[#allocation2 + $0x40] sm:$0xff] %vm185, -1e+30
        %195 = vst.msk [vmem:[#allocation2 + $0x48] sm:$0xff] %vm185, -1e+30
        %196 = vst.msk [vmem:[#allocation2 + $0x50] sm:$0xff] %vm185, -1e+30
        %197 = vst.msk [vmem:[#allocation2 + $0x58] sm:$0xff] %vm185, -1e+30
        %198 = vst.msk [vmem:[#allocation2 + $0x60] sm:$0xff] %vm185, -1e+30
        %199 = vst.msk [vmem:[#allocation2 + $0x68] sm:$0xff] %vm185, -1e+30
        %200 = vst.msk [vmem:[#allocation2 + $0x70] sm:$0xff] %vm185, -1e+30
        %201 = vst.msk [vmem:[#allocation2 + $0x78] sm:$0xff] %vm185, -1e+30
        %202 = vst.msk [vmem:[#allocation3] sm:$0xff] %vm185, 0.0
        %203 = vst.msk [vmem:[#allocation3 + $0x8] sm:$0xff] %vm185, 0.0
        %204 = vst.msk [vmem:[#allocation3 + $0x10] sm:$0xff] %vm185, 0.0
        %205 = vst.msk [vmem:[#allocation3 + $0x18] sm:$0xff] %vm185, 0.0
        %206 = vst.msk [vmem:[#allocation3 + $0x20] sm:$0xff] %vm185, 0.0
        %207 = vst.msk [vmem:[#allocation3 + $0x28] sm:$0xff] %vm185, 0.0
        %208 = vst.msk [vmem:[#allocation3 + $0x30] sm:$0xff] %vm185, 0.0
        %209 = vst.msk [vmem:[#allocation3 + $0x38] sm:$0xff] %vm185, 0.0
        %210 = vst.msk [vmem:[#allocation3 + $0x40] sm:$0xff] %vm185, 0.0
        %211 = vst.msk [vmem:[#allocation3 + $0x48] sm:$0xff] %vm185, 0.0
        %212 = vst.msk [vmem:[#allocation3 + $0x50] sm:$0xff] %vm185, 0.0
        %213 = vst.msk [vmem:[#allocation3 + $0x58] sm:$0xff] %vm185, 0.0
        %214 = vst.msk [vmem:[#allocation3 + $0x60] sm:$0xff] %vm185, 0.0
        %215 = vst.msk [vmem:[#allocation3 + $0x68] sm:$0xff] %vm185, 0.0
        %216 = vst.msk [vmem:[#allocation3 + $0x70] sm:$0xff] %vm185, 0.0
        %217 = vst.msk [vmem:[#allocation3 + $0x78] sm:$0xff] %vm185, 0.0
      $region32: #{tpu_custom_call.1} parent=27 // pred_fallthru
        _
      %v218 = vld [vmem:[%s167] sm:$0xff]
      %v219 = vld [vmem:[%s167 + $0x8] sm:$0xff]
      %v220 = vld [vmem:[%s167 + $0x10] sm:$0xff]
      %v221 = vld [vmem:[%s167 + $0x18] sm:$0xff]
      %v222 = vld [vmem:[%s167 + $0x20] sm:$0xff]
      %v223 = vld [vmem:[%s167 + $0x28] sm:$0xff]
      %v224 = vld [vmem:[%s167 + $0x30] sm:$0xff]
      %v225 = vld [vmem:[%s167 + $0x38] sm:$0xff]
      %v226 = vld [vmem:[%s167 + $0x40] sm:$0xff]
      %v227 = vld [vmem:[%s167 + $0x48] sm:$0xff]
      %v228 = vld [vmem:[%s167 + $0x50] sm:$0xff]
      %v229 = vld [vmem:[%s167 + $0x58] sm:$0xff]
      %v230 = vld [vmem:[%s167 + $0x60] sm:$0xff]
      %v231 = vld [vmem:[%s167 + $0x68] sm:$0xff]
      %v232 = vld [vmem:[%s167 + $0x70] sm:$0xff]
      %v233 = vld [vmem:[%s167 + $0x78] sm:$0xff]
      %v234 = vmul.f32 %v218, 10.0
      %v235 = vmul.f32 %v219, 10.0
      %v236 = vmul.f32 %v220, 10.0
      %v237 = vmul.f32 %v221, 10.0
      %v238 = vmul.f32 %v222, 10.0
      %v239 = vmul.f32 %v223, 10.0
      %v240 = vmul.f32 %v224, 10.0
      %v241 = vmul.f32 %v225, 10.0
      %v242 = vmul.f32 %v226, 10.0
      %v243 = vmul.f32 %v227, 10.0
      %v244 = vmul.f32 %v228, 10.0
      %v245 = vmul.f32 %v229, 10.0
      %v246 = vmul.f32 %v230, 10.0
      %v247 = vmul.f32 %v231, 10.0
      %v248 = vmul.f32 %v232, 10.0
      %v249 = vmul.f32 %v233, 10.0
      %v250 = vld [vmem:[%s173] sm:$0xff]
      %v251 = vld [vmem:[%s173 + $0x8] sm:$0xff]
      %v252 = vld [vmem:[%s173 + $0x10] sm:$0xff]
      %v253 = vld [vmem:[%s173 + $0x18] sm:$0xff]
      %v254 = vld [vmem:[%s173 + $0x20] sm:$0xff]
      %v255 = vld [vmem:[%s173 + $0x28] sm:$0xff]
      %v256 = vld [vmem:[%s173 + $0x30] sm:$0xff]
      %v257 = vld [vmem:[%s173 + $0x38] sm:$0xff]
      %v258 = vld [vmem:[%s173 + $0x40] sm:$0xff]
      %v259 = vld [vmem:[%s173 + $0x48] sm:$0xff]
      %v260 = vld [vmem:[%s173 + $0x50] sm:$0xff]
      %v261 = vld [vmem:[%s173 + $0x58] sm:$0xff]
      %v262 = vld [vmem:[%s173 + $0x60] sm:$0xff]
      %v263 = vld [vmem:[%s173 + $0x68] sm:$0xff]
      %v264 = vld [vmem:[%s173 + $0x70] sm:$0xff]
      %v265 = vld [vmem:[%s173 + $0x78] sm:$0xff]
      %vm266 = vcmask 261120
      %v268 = vsel %vm266, %v234, 0
      %v271 = vsel %vm266, %v235, 0
      %v274 = vsel %vm266, %v236, 0
      %v277 = vsel %vm266, %v237, 0
      %v280 = vsel %vm266, %v238, 0
      %v283 = vsel %vm266, %v239, 0
      %v286 = vsel %vm266, %v240, 0
      %v289 = vsel %vm266, %v241, 0
      %v292 = vsel %vm266, %v242, 0
      %v295 = vsel %vm266, %v243, 0
      %v298 = vsel %vm266, %v244, 0
      %v301 = vsel %vm266, %v245, 0
      %v304 = vsel %vm266, %v246, 0
      %v307 = vsel %vm266, %v247, 0
      %v310 = vsel %vm266, %v248, 0
      %v313 = vsel %vm266, %v249, 0
      %v316 = vsel %vm266, %v250, 0
      %v319 = vsel %vm266, %v251, 0
      %v322 = vsel %vm266, %v252, 0
      %v325 = vsel %vm266, %v253, 0
      %v328 = vsel %vm266, %v254, 0
      %v331 = vsel %vm266, %v255, 0
      %v334 = vsel %vm266, %v256, 0
      %v337 = vsel %vm266, %v257, 0
      %v340 = vsel %vm266, %v258, 0
      %v343 = vsel %vm266, %v259, 0
      %v346 = vsel %vm266, %v260, 0
      %v349 = vsel %vm266, %v261, 0
      %v352 = vsel %vm266, %v262, 0
      %v355 = vsel %vm266, %v263, 0
      %v358 = vsel %vm266, %v264, 0
      %v361 = vsel %vm266, %v265, 0
      %363 = vmatprep.subr.mxu0 0.0
      %364 = vmatpush1.xpose.msra.mxu0 %v316
      %365 = vmatprep.subr.mxu0 0.0
      %366 = vmatpush1.xpose.msra.mxu0 %v319
      %367 = vmatprep.subr.mxu0 0.0
      %368 = vmatpush1.xpose.msra.mxu0 %v322
      %369 = vmatprep.subr.mxu0 0.0
      %370 = vmatpush1.xpose.msra.mxu0 %v325
      %371 = vmatprep.subr.mxu0 0.0
      %372 = vmatpush1.xpose.msra.mxu0 %v328
      %373 = vmatprep.subr.mxu0 0.0
      %374 = vmatpush1.xpose.msra.mxu0 %v331
      %375 = vmatprep.subr.mxu0 0.0
      %376 = vmatpush1.xpose.msra.mxu0 %v334
      %377 = vmatprep.subr.mxu0 0.0
      %378 = vmatpush1.xpose.msra.mxu0 %v337
      %379 = vmatprep.subr.mxu0 0.0
      %380 = vmatpush1.xpose.msra.mxu0 %v340
      %381 = vmatprep.subr.mxu0 0.0
      %382 = vmatpush1.xpose.msra.mxu0 %v343
      %383 = vmatprep.subr.mxu0 0.0
      %384 = vmatpush1.xpose.msra.mxu0 %v346
      %385 = vmatprep.subr.mxu0 0.0
      %386 = vmatpush1.xpose.msra.mxu0 %v349
      %387 = vmatprep.subr.mxu0 0.0
      %388 = vmatpush1.xpose.msra.mxu0 %v352
      %389 = vmatprep.subr.mxu0 0.0
      %390 = vmatpush1.xpose.msra.mxu0 %v355
      %391 = vmatprep.subr.mxu0 0.0
      %392 = vmatpush1.xpose.msra.mxu0 %v358
      %393 = vmatprep.subr.mxu0 0.0
      %394 = vmatpush1.xpose.msra.mxu0 %v361
      %395 = vmatprep.subr.mxu0 0.0
      %396 = vmatpush1.xpose.msra.mxu0 0.0
      %397 = vmatprep.subr.mxu0 0.0
      %398 = vmatpush1.xpose.msra.mxu0 0.0
      %399 = vmatprep.subr.mxu0 0.0
      %400 = vmatpush1.xpose.msra.mxu0 0.0
      %401 = vmatprep.subr.mxu0 0.0
      %402 = vmatpush1.xpose.msra.mxu0 0.0
      %403 = vmatprep.subr.mxu0 0.0
      %404 = vmatpush1.xpose.msra.mxu0 0.0
      %405 = vmatprep.subr.mxu0 0.0
      %406 = vmatpush1.xpose.msra.mxu0 0.0
      %407 = vmatprep.subr.mxu0 0.0
      %408 = vmatpush1.xpose.msra.mxu0 0.0
      %409 = vmatprep.subr.mxu0 0.0
      %410 = vmatpush1.xpose.msra.mxu0 0.0
      %411 = vmatprep.subr.mxu0 0.0
      %412 = vmatpush1.xpose.msra.mxu0 0.0
      %413 = vmatprep.subr.mxu0 0.0
      %414 = vmatpush1.xpose.msra.mxu0 0.0
      %415 = vmatprep.subr.mxu0 0.0
      %416 = vmatpush1.xpose.msra.mxu0 0.0
      %417 = vmatprep.subr.mxu0 0.0
      %418 = vmatpush1.xpose.msra.mxu0 0.0
      %419 = vmatprep.subr.mxu0 0.0
      %420 = vmatpush1.xpose.msra.mxu0 0.0
      %421 = vmatprep.subr.mxu0 0.0
      %422 = vmatpush1.xpose.msra.mxu0 0.0
      %423 = vmatprep.subr.mxu0 0.0
      %424 = vmatpush1.xpose.msra.mxu0 0.0
      %425 = vmatprep.subr.mxu0 0.0
      %426 = vmatpush1.xpose.msra.mxu0 0.0
      %427 = vmatprep.mubr.f32.mxu0 0.0
      %428 = vmatmul.mubr.f32.gmra.mrb[0].mxu0 %v268
      %v429 = vpop.f32.mrb[0].mxu0
      %v430 = vadd.f32 0.0, %v429
      %v431 = vpop.f32.mrb[0].mxu0
      %432 = vmatprep.mubr.f32.mxu0 0.0
      %433 = vmatmul.mubr.f32.gmra.mrb[0].mxu0 %v271
      %v434 = vpop.f32.mrb[0].mxu0
      %v435 = vadd.f32 0.0, %v434
      %v436 = vpop.f32.mrb[0].mxu0
      %437 = vmatprep.mubr.f32.mxu0 0.0
      %438 = vmatmul.mubr.f32.gmra.mrb[0].mxu0 %v274
      %v439 = vpop.f32.mrb[0].mxu0
      %v440 = vadd.f32 0.0, %v439
      %v441 = vpop.f32.mrb[0].mxu0
      %442 = vmatprep.mubr.f32.mxu0 0.0
      %443 = vmatmul.mubr.f32.gmra.mrb[0].mxu0 %v277
      %v444 = vpop.f32.mrb[0].mxu0
      %v445 = vadd.f32 0.0, %v444
      %v446 = vpop.f32.mrb[0].mxu0
      %447 = vmatprep.mubr.f32.mxu0 0.0
      %448 = vmatmul.mubr.f32.gmra.mrb[0].mxu0 %v280
      %v449 = vpop.f32.mrb[0].mxu0
      %v450 = vadd.f32 0.0, %v449
      %v451 = vpop.f32.mrb[0].mxu0
      %452 = vmatprep.mubr.f32.mxu0 0.0
      %453 = vmatmul.mubr.f32.gmra.mrb[0].mxu0 %v283
      %v454 = vpop.f32.mrb[0].mxu0
      %v455 = vadd.f32 0.0, %v454
      %v456 = vpop.f32.mrb[0].mxu0
      %457 = vmatprep.mubr.f32.mxu0 0.0
      %458 = vmatmul.mubr.f32.gmra.mrb[0].mxu0 %v286
      %v459 = vpop.f32.mrb[0].mxu0
      %v460 = vadd.f32 0.0, %v459
      %v461 = vpop.f32.mrb[0].mxu0
      %462 = vmatprep.mubr.f32.mxu0 0.0
      %463 = vmatmul.mubr.f32.gmra.mrb[0].mxu0 %v289
      %v464 = vpop.f32.mrb[0].mxu0
      %v465 = vadd.f32 0.0, %v464
      %v466 = vpop.f32.mrb[0].mxu0
      %467 = vmatprep.mubr.f32.mxu0 0.0
      %468 = vmatmul.mubr.f32.gmra.mrb[0].mxu0 %v292
      %v469 = vpop.f32.mrb[0].mxu0
      %v470 = vadd.f32 0.0, %v469
      %v471 = vpop.f32.mrb[0].mxu0
      %472 = vmatprep.mubr.f32.mxu0 0.0
      %473 = vmatmul.mubr.f32.gmra.mrb[0].mxu0 %v295
      %v474 = vpop.f32.mrb[0].mxu0
      %v475 = vadd.f32 0.0, %v474
      %v476 = vpop.f32.mrb[0].mxu0
      %477 = vmatprep.mubr.f32.mxu0 0.0
      %478 = vmatmul.mubr.f32.gmra.mrb[0].mxu0 %v298
      %v479 = vpop.f32.mrb[0].mxu0
      %v480 = vadd.f32 0.0, %v479
      %v481 = vpop.f32.mrb[0].mxu0
      %482 = vmatprep.mubr.f32.mxu0 0.0
      %483 = vmatmul.mubr.f32.gmra.mrb[0].mxu0 %v301
      %v484 = vpop.f32.mrb[0].mxu0
      %v485 = vadd.f32 0.0, %v484
      %v486 = vpop.f32.mrb[0].mxu0
      %487 = vmatprep.mubr.f32.mxu0 0.0
      %488 = vmatmul.mubr.f32.gmra.mrb[0].mxu0 %v304
      %v489 = vpop.f32.mrb[0].mxu0
      %v490 = vadd.f32 0.0, %v489
      %v491 = vpop.f32.mrb[0].mxu0
      %492 = vmatprep.mubr.f32.mxu0 0.0
      %493 = vmatmul.mubr.f32.gmra.mrb[0].mxu0 %v307
      %v494 = vpop.f32.mrb[0].mxu0
      %v495 = vadd.f32 0.0, %v494
      %v496 = vpop.f32.mrb[0].mxu0
      %497 = vmatprep.mubr.f32.mxu0 0.0
      %498 = vmatmul.mubr.f32.gmra.mrb[0].mxu0 %v310
      %v499 = vpop.f32.mrb[0].mxu0
      %v500 = vadd.f32 0.0, %v499
      %v501 = vpop.f32.mrb[0].mxu0
      %502 = vmatprep.mubr.f32.mxu0 0.0
      %503 = vmatmul.mubr.f32.gmra.mrb[0].mxu0 %v313
      %v504 = vpop.f32.mrb[0].mxu0
      %v505 = vadd.f32 0.0, %v504
      %v506 = vpop.f32.mrb[0].mxu0
      %507 = vdwg.mxu0
      %v508 = vlaneseq
      %v509 = vand.u32 %v508, 127
      %vm510 = vcmp.ge.s32.totalorder %v509, 4
      %v511 = vsel %vm510, -1e+30, %v430
      %v512 = vsel %vm510, -1e+30, %v435
      %v513 = vsel %vm510, -1e+30, %v440
      %v514 = vsel %vm510, -1e+30, %v445
      %v515 = vsel %vm510, -1e+30, %v450
      %v516 = vsel %vm510, -1e+30, %v455
      %v517 = vsel %vm510, -1e+30, %v460
      %v518 = vsel %vm510, -1e+30, %v465
      %v519 = vsel %vm510, -1e+30, %v470
      %v520 = vsel %vm510, -1e+30, %v475
      %v521 = vsel %vm510, -1e+30, %v480
      %v522 = vsel %vm510, -1e+30, %v485
      %v523 = vsel %vm510, -1e+30, %v490
      %v524 = vsel %vm510, -1e+30, %v495
      %v525 = vsel %vm510, -1e+30, %v500
      %v526 = vsel %vm510, -1e+30, %v505
      %p527 = scmp.eq.s32.totalorder %s17, %s18
      // Predicated region
      $region33: #{tpu_custom_call.1} parent=27 // pred_check
        %p528 = pneg %p527
      $region34: #{tpu_custom_call.1} parent=27 // pred_check_branch
        %530 = sbr.rel (%p528) target = $region36
      $region35: #{tpu_custom_call.1} parent=27 // pred_region
        %v531 = vlaneseq
        %v532 = vshrl.u32 %v531, 7
        %v533 = vadd.s32 %v532, 8
        %v534 = vadd.s32 %v532, 16
        %v535 = vadd.s32 %v532, 24
        %v536 = vadd.s32 %v532, 32
        %v537 = vadd.s32 %v532, 40
        %v538 = vadd.s32 %v532, 48
        %v539 = vadd.s32 %v532, 56
        %v540 = vadd.s32 %v532, 64
        %v541 = vadd.s32 %v532, 72
        %v542 = vadd.s32 %v532, 80
        %v543 = vadd.s32 %v532, 88
        %v544 = vadd.s32 %v532, 96
        %v545 = vadd.s32 %v532, 104
        %v546 = vadd.s32 %v532, 112
        %v547 = vadd.s32 %v532, 120
        %vm548 = vcmp.eq.s32.totalorder %v532, %v509
        %vm549 = vcmp.eq.s32.totalorder %v533, %v509
        %vm550 = vcmp.eq.s32.totalorder %v534, %v509
        %vm551 = vcmp.eq.s32.totalorder %v535, %v509
        %vm552 = vcmp.eq.s32.totalorder %v536, %v509
        %vm553 = vcmp.eq.s32.totalorder %v537, %v509
        %vm554 = vcmp.eq.s32.totalorder %v538, %v509
        %vm555 = vcmp.eq.s32.totalorder %v539, %v509
        %vm556 = vcmp.eq.s32.totalorder %v540, %v509
        %vm557 = vcmp.eq.s32.totalorder %v541, %v509
        %vm558 = vcmp.eq.s32.totalorder %v542, %v509
        %vm559 = vcmp.eq.s32.totalorder %v543, %v509
        %vm560 = vcmp.eq.s32.totalorder %v544, %v509
        %vm561 = vcmp.eq.s32.totalorder %v545, %v509
        %vm562 = vcmp.eq.s32.totalorder %v546, %v509
        %vm563 = vcmp.eq.s32.totalorder %v547, %v509
        %v564 = vsel %vm548, -1e+30, %v511
        %v565 = vsel %vm549, -1e+30, %v512
        %v566 = vsel %vm550, -1e+30, %v513
        %v567 = vsel %vm551, -1e+30, %v514
        %v568 = vsel %vm552, -1e+30, %v515
        %v569 = vsel %vm553, -1e+30, %v516
        %v570 = vsel %vm554, -1e+30, %v517
        %v571 = vsel %vm555, -1e+30, %v518
        %v572 = vsel %vm556, -1e+30, %v519
        %v573 = vsel %vm557, -1e+30, %v520
        %v574 = vsel %vm558, -1e+30, %v521
        %v575 = vsel %vm559, -1e+30, %v522
        %v576 = vsel %vm560, -1e+30, %v523
        %v577 = vsel %vm561, -1e+30, %v524
        %v578 = vsel %vm562, -1e+30, %v525
        %v579 = vsel %vm563, -1e+30, %v526
      $region36: #{tpu_custom_call.1} parent=27 // pred_fallthru
        %v580 = vphi 0, %v564
        %v581 = vphi 0, %v565
        %v582 = vphi 0, %v566
        %v583 = vphi 0, %v567
        %v584 = vphi 0, %v568
        %v585 = vphi 0, %v569
        %v586 = vphi 0, %v570
        %v587 = vphi 0, %v571
        %v588 = vphi 0, %v572
        %v589 = vphi 0, %v573
        %v590 = vphi 0, %v574
        %v591 = vphi 0, %v575
        %v592 = vphi 0, %v576
        %v593 = vphi 0, %v577
        %v594 = vphi 0, %v578
        %v595 = vphi 0, %v579
      %p596 = pneg %p527
      // Predicated region
      $region37: #{tpu_custom_call.1} parent=27 // pred_check
        _
      $region38: #{tpu_custom_call.1} parent=27 // pred_check_branch
        %598 = sbr.rel (%p527) target = $region40
      $region39: #{tpu_custom_call.1} parent=27 // pred_region
        _
      $region40: #{tpu_custom_call.1} parent=27 // pred_fallthru
        %v599 = vphi %v580, %v511
        %v600 = vphi %v581, %v512
        %v601 = vphi %v582, %v513
        %v602 = vphi %v583, %v514
        %v603 = vphi %v584, %v515
        %v604 = vphi %v585, %v516
        %v605 = vphi %v586, %v517
        %v606 = vphi %v587, %v518
        %v607 = vphi %v588, %v519
        %v608 = vphi %v589, %v520
        %v609 = vphi %v590, %v521
        %v610 = vphi %v591, %v522
        %v611 = vphi %v592, %v523
        %v612 = vphi %v593, %v524
        %v613 = vphi %v594, %v525
        %v614 = vphi %v595, %v526
      %v615 = vld [vmem:[#allocation2] sm:$0xff]
      %v616 = vld [vmem:[#allocation2 + $0x8] sm:$0xff]
      %v617 = vld [vmem:[#allocation2 + $0x10] sm:$0xff]
      %v618 = vld [vmem:[#allocation2 + $0x18] sm:$0xff]
      %v619 = vld [vmem:[#allocation2 + $0x20] sm:$0xff]
      %v620 = vld [vmem:[#allocation2 + $0x28] sm:$0xff]
      %v621 = vld [vmem:[#allocation2 + $0x30] sm:$0xff]
      %v622 = vld [vmem:[#allocation2 + $0x38] sm:$0xff]
      %v623 = vld [vmem:[#allocation2 + $0x40] sm:$0xff]
      %v624 = vld [vmem:[#allocation2 + $0x48] sm:$0xff]
      %v625 = vld [vmem:[#allocation2 + $0x50] sm:$0xff]
      %v626 = vld [vmem:[#allocation2 + $0x58] sm:$0xff]
      %v627 = vld [vmem:[#allocation2 + $0x60] sm:$0xff]
      %v628 = vld [vmem:[#allocation2 + $0x68] sm:$0xff]
      %v629 = vld [vmem:[#allocation2 + $0x70] sm:$0xff]
      %v630 = vld [vmem:[#allocation2 + $0x78] sm:$0xff]
      %631 = vmax.xlane.f32.xlu0 %v599
      %v632 = vpop.xlane.xlu0 %631
      %633 = vmax.xlane.f32.xlu0 %v600
      %v634 = vpop.xlane.xlu0 %633
      %635 = vmax.xlane.f32.xlu0 %v601
      %v636 = vpop.xlane.xlu0 %635
      %637 = vmax.xlane.f32.xlu0 %v602
      %v638 = vpop.xlane.xlu0 %637
      %639 = vmax.xlane.f32.xlu0 %v603
      %v640 = vpop.xlane.xlu0 %639
      %641 = vmax.xlane.f32.xlu0 %v604
      %v642 = vpop.xlane.xlu0 %641
      %643 = vmax.xlane.f32.xlu0 %v605
      %v644 = vpop.xlane.xlu0 %643
      %645 = vmax.xlane.f32.xlu0 %v606
      %v646 = vpop.xlane.xlu0 %645
      %647 = vmax.xlane.f32.xlu0 %v607
      %v648 = vpop.xlane.xlu0 %647
      %649 = vmax.xlane.f32.xlu0 %v608
      %v650 = vpop.xlane.xlu0 %649
      %651 = vmax.xlane.f32.xlu0 %v609
      %v652 = vpop.xlane.xlu0 %651
      %653 = vmax.xlane.f32.xlu0 %v610
      %v654 = vpop.xlane.xlu0 %653
      %655 = vmax.xlane.f32.xlu0 %v611
      %v656 = vpop.xlane.xlu0 %655
      %657 = vmax.xlane.f32.xlu0 %v612
      %v658 = vpop.xlane.xlu0 %657
      %659 = vmax.xlane.f32.xlu0 %v613
      %v660 = vpop.xlane.xlu0 %659
      %661 = vmax.xlane.f32.xlu0 %v614
      %v662 = vpop.xlane.xlu0 %661
      %v663 = vmax.f32 %v615, %v632
      %v664 = vmax.f32 %v616, %v634
      %v665 = vmax.f32 %v617, %v636
      %v666 = vmax.f32 %v618, %v638
      %v667 = vmax.f32 %v619, %v640
      %v668 = vmax.f32 %v620, %v642
      %v669 = vmax.f32 %v621, %v644
      %v670 = vmax.f32 %v622, %v646
      %v671 = vmax.f32 %v623, %v648
      %v672 = vmax.f32 %v624, %v650
      %v673 = vmax.f32 %v625, %v652
      %v674 = vmax.f32 %v626, %v654
      %v675 = vmax.f32 %v627, %v656
      %v676 = vmax.f32 %v628, %v658
      %v677 = vmax.f32 %v629, %v660
      %v678 = vmax.f32 %v630, %v662
      %v679 = vsub.f32 %v615, %v663
      %v680 = vsub.f32 %v616, %v664
      %v681 = vsub.f32 %v617, %v665
      %v682 = vsub.f32 %v618, %v666
      %v683 = vsub.f32 %v619, %v667
      %v684 = vsub.f32 %v620, %v668
      %v685 = vsub.f32 %v621, %v669
      %v686 = vsub.f32 %v622, %v670
      %v687 = vsub.f32 %v623, %v671
      %v688 = vsub.f32 %v624, %v672
      %v689 = vsub.f32 %v625, %v673
      %v690 = vsub.f32 %v626, %v674
      %v691 = vsub.f32 %v627, %v675
      %v692 = vsub.f32 %v628, %v676
      %v693 = vsub.f32 %v629, %v677
      %v694 = vsub.f32 %v630, %v678
      %v695 = vmul.f32 %v679, 1.442695
      %v696 = vpow.pop %v695
      %v697 = vmul.f32 %v680, 1.442695
      %v698 = vpow.pop %v697
      %v699 = vmul.f32 %v681, 1.442695
      %v700 = vpow.pop %v699
      %v701 = vmul.f32 %v682, 1.442695
      %v702 = vpow.pop %v701
      %v703 = vmul.f32 %v683, 1.442695
      %v704 = vpow.pop %v703
      %v705 = vmul.f32 %v684, 1.442695
      %v706 = vpow.pop %v705
      %v707 = vmul.f32 %v685, 1.442695
      %v708 = vpow.pop %v707
      %v709 = vmul.f32 %v686, 1.442695
      %v710 = vpow.pop %v709
      %v711 = vmul.f32 %v687, 1.442695
      %v712 = vpow.pop %v711
      %v713 = vmul.f32 %v688, 1.442695
      %v714 = vpow.pop %v713
      %v715 = vmul.f32 %v689, 1.442695
      %v716 = vpow.pop %v715
      %v717 = vmul.f32 %v690, 1.442695
      %v718 = vpow.pop %v717
      %v719 = vmul.f32 %v691, 1.442695
      %v720 = vpow.pop %v719
      %v721 = vmul.f32 %v692, 1.442695
      %v722 = vpow.pop %v721
      %v723 = vmul.f32 %v693, 1.442695
      %v724 = vpow.pop %v723
      %v725 = vmul.f32 %v694, 1.442695
      %v726 = vpow.pop %v725
      %728 = vset.pattern.permute.xlu0 0
      %729 = vperm.xlu0 %728, %v663
      %v730 = vpop.permute.xlu0 %729
      %733 = vset.pattern.permute.xlu0 0
      %734 = vperm.xlu0 %733, %v664
      %v735 = vpop.permute.xlu0 %734
      %738 = vset.pattern.permute.xlu0 0
      %739 = vperm.xlu0 %738, %v665
      %v740 = vpop.permute.xlu0 %739
      %743 = vset.pattern.permute.xlu0 0
      %744 = vperm.xlu0 %743, %v666
      %v745 = vpop.permute.xlu0 %744
      %748 = vset.pattern.permute.xlu0 0
      %749 = vperm.xlu0 %748, %v667
      %v750 = vpop.permute.xlu0 %749
      %753 = vset.pattern.permute.xlu0 0
      %754 = vperm.xlu0 %753, %v668
      %v755 = vpop.permute.xlu0 %754
      %758 = vset.pattern.permute.xlu0 0
      %759 = vperm.xlu0 %758, %v669
      %v760 = vpop.permute.xlu0 %759
      %763 = vset.pattern.permute.xlu0 0
      %764 = vperm.xlu0 %763, %v670
      %v765 = vpop.permute.xlu0 %764
      %768 = vset.pattern.permute.xlu0 0
      %769 = vperm.xlu0 %768, %v671
      %v770 = vpop.permute.xlu0 %769
      %773 = vset.pattern.permute.xlu0 0
      %774 = vperm.xlu0 %773, %v672
      %v775 = vpop.permute.xlu0 %774
      %778 = vset.pattern.permute.xlu0 0
      %779 = vperm.xlu0 %778, %v673
      %v780 = vpop.permute.xlu0 %779
      %783 = vset.pattern.permute.xlu0 0
      %784 = vperm.xlu0 %783, %v674
      %v785 = vpop.permute.xlu0 %784
      %788 = vset.pattern.permute.xlu0 0
      %789 = vperm.xlu0 %788, %v675
      %v790 = vpop.permute.xlu0 %789
      %793 = vset.pattern.permute.xlu0 0
      %794 = vperm.xlu0 %793, %v676
      %v795 = vpop.permute.xlu0 %794
      %798 = vset.pattern.permute.xlu0 0
      %799 = vperm.xlu0 %798, %v677
      %v800 = vpop.permute.xlu0 %799
      %803 = vset.pattern.permute.xlu0 0
      %804 = vperm.xlu0 %803, %v678
      %v805 = vpop.permute.xlu0 %804
      %v807 = vsub.f32 %v599, %v730
      %v808 = vsub.f32 %v600, %v735
      %v809 = vsub.f32 %v601, %v740
      %v810 = vsub.f32 %v602, %v745
      %v811 = vsub.f32 %v603, %v750
      %v812 = vsub.f32 %v604, %v755
      %v813 = vsub.f32 %v605, %v760
      %v814 = vsub.f32 %v606, %v765
      %v815 = vsub.f32 %v607, %v770
      %v816 = vsub.f32 %v608, %v775
      %v817 = vsub.f32 %v609, %v780
      %v818 = vsub.f32 %v610, %v785
      %v819 = vsub.f32 %v611, %v790
      %v820 = vsub.f32 %v612, %v795
      %v821 = vsub.f32 %v613, %v800
      %v822 = vsub.f32 %v614, %v805
      %v823 = vmul.f32 %v807, 1.442695
      %v824 = vpow.pop %v823
      %v825 = vmul.f32 %v808, 1.442695
      %v826 = vpow.pop %v825
      %v827 = vmul.f32 %v809, 1.442695
      %v828 = vpow.pop %v827
      %v829 = vmul.f32 %v810, 1.442695
      %v830 = vpow.pop %v829
      %v831 = vmul.f32 %v811, 1.442695
      %v832 = vpow.pop %v831
      %v833 = vmul.f32 %v812, 1.442695
      %v834 = vpow.pop %v833
      %v835 = vmul.f32 %v813, 1.442695
      %v836 = vpow.pop %v835
      %v837 = vmul.f32 %v814, 1.442695
      %v838 = vpow.pop %v837
      %v839 = vmul.f32 %v815, 1.442695
      %v840 = vpow.pop %v839
      %v841 = vmul.f32 %v816, 1.442695
      %v842 = vpow.pop %v841
      %v843 = vmul.f32 %v817, 1.442695
      %v844 = vpow.pop %v843
      %v845 = vmul.f32 %v818, 1.442695
      %v846 = vpow.pop %v845
      %v847 = vmul.f32 %v819, 1.442695
      %v848 = vpow.pop %v847
      %v849 = vmul.f32 %v820, 1.442695
      %v850 = vpow.pop %v849
      %v851 = vmul.f32 %v821, 1.442695
      %v852 = vpow.pop %v851
      %v853 = vmul.f32 %v822, 1.442695
      %v854 = vpow.pop %v853
      %v855 = vld [vmem:[#allocation3] sm:$0xff]
      %v856 = vld [vmem:[#allocation3 + $0x8] sm:$0xff]
      %v857 = vld [vmem:[#allocation3 + $0x10] sm:$0xff]
      %v858 = vld [vmem:[#allocation3 + $0x18] sm:$0xff]
      %v859 = vld [vmem:[#allocation3 + $0x20] sm:$0xff]
      %v860 = vld [vmem:[#allocation3 + $0x28] sm:$0xff]
      %v861 = vld [vmem:[#allocation3 + $0x30] sm:$0xff]
      %v862 = vld [vmem:[#allocation3 + $0x38] sm:$0xff]
      %v863 = vld [vmem:[#allocation3 + $0x40] sm:$0xff]
      %v864 = vld [vmem:[#allocation3 + $0x48] sm:$0xff]
      %v865 = vld [vmem:[#allocation3 + $0x50] sm:$0xff]
      %v866 = vld [vmem:[#allocation3 + $0x58] sm:$0xff]
      %v867 = vld [vmem:[#allocation3 + $0x60] sm:$0xff]
      %v868 = vld [vmem:[#allocation3 + $0x68] sm:$0xff]
      %v869 = vld [vmem:[#allocation3 + $0x70] sm:$0xff]
      %v870 = vld [vmem:[#allocation3 + $0x78] sm:$0xff]
      %v871 = vmul.f32 %v696, %v855
      %v872 = vmul.f32 %v698, %v856
      %v873 = vmul.f32 %v700, %v857
      %v874 = vmul.f32 %v702, %v858
      %v875 = vmul.f32 %v704, %v859
      %v876 = vmul.f32 %v706, %v860
      %v877 = vmul.f32 %v708, %v861
      %v878 = vmul.f32 %v710, %v862
      %v879 = vmul.f32 %v712, %v863
      %v880 = vmul.f32 %v714, %v864
      %v881 = vmul.f32 %v716, %v865
      %v882 = vmul.f32 %v718, %v866
      %v883 = vmul.f32 %v720, %v867
      %v884 = vmul.f32 %v722, %v868
      %v885 = vmul.f32 %v724, %v869
      %v886 = vmul.f32 %v726, %v870
      %887 = vadd.xlane.f32.xlu0 %v824
      %v888 = vpop.xlane.xlu0 %887
      %889 = vadd.xlane.f32.xlu0 %v826
      %v890 = vpop.xlane.xlu0 %889
      %891 = vadd.xlane.f32.xlu0 %v828
      %v892 = vpop.xlane.xlu0 %891
      %893 = vadd.xlane.f32.xlu0 %v830
      %v894 = vpop.xlane.xlu0 %893
      %895 = vadd.xlane.f32.xlu0 %v832
      %v896 = vpop.xlane.xlu0 %895
      %897 = vadd.xlane.f32.xlu0 %v834
      %v898 = vpop.xlane.xlu0 %897
      %899 = vadd.xlane.f32.xlu0 %v836
      %v900 = vpop.xlane.xlu0 %899
      %901 = vadd.xlane.f32.xlu0 %v838
      %v902 = vpop.xlane.xlu0 %901
      %903 = vadd.xlane.f32.xlu0 %v840
      %v904 = vpop.xlane.xlu0 %903
      %905 = vadd.xlane.f32.xlu0 %v842
      %v906 = vpop.xlane.xlu0 %905
      %907 = vadd.xlane.f32.xlu0 %v844
      %v908 = vpop.xlane.xlu0 %907
      %909 = vadd.xlane.f32.xlu0 %v846
      %v910 = vpop.xlane.xlu0 %909
      %911 = vadd.xlane.f32.xlu0 %v848
      %v912 = vpop.xlane.xlu0 %911
      %913 = vadd.xlane.f32.xlu0 %v850
      %v914 = vpop.xlane.xlu0 %913
      %915 = vadd.xlane.f32.xlu0 %v852
      %v916 = vpop.xlane.xlu0 %915
      %917 = vadd.xlane.f32.xlu0 %v854
      %v918 = vpop.xlane.xlu0 %917
      %v919 = vadd.f32 %v871, %v888
      %v920 = vadd.f32 %v872, %v890
      %v921 = vadd.f32 %v873, %v892
      %v922 = vadd.f32 %v874, %v894
      %v923 = vadd.f32 %v875, %v896
      %v924 = vadd.f32 %v876, %v898
      %v925 = vadd.f32 %v877, %v900
      %v926 = vadd.f32 %v878, %v902
      %v927 = vadd.f32 %v879, %v904
      %v928 = vadd.f32 %v880, %v906
      %v929 = vadd.f32 %v881, %v908
      %v930 = vadd.f32 %v882, %v910
      %v931 = vadd.f32 %v883, %v912
      %v932 = vadd.f32 %v884, %v914
      %v933 = vadd.f32 %v885, %v916
      %v934 = vadd.f32 %v886, %v918
      %vm935 = vcmask 7168
      %936 = vst.msk [vmem:[#allocation3] sm:$0xff] %vm935, %v919
      %937 = vst.msk [vmem:[#allocation3 + $0x8] sm:$0xff] %vm935, %v920
      %938 = vst.msk [vmem:[#allocation3 + $0x10] sm:$0xff] %vm935, %v921
      %939 = vst.msk [vmem:[#allocation3 + $0x18] sm:$0xff] %vm935, %v922
      %940 = vst.msk [vmem:[#allocation3 + $0x20] sm:$0xff] %vm935, %v923
      %941 = vst.msk [vmem:[#allocation3 + $0x28] sm:$0xff] %vm935, %v924
      %942 = vst.msk [vmem:[#allocation3 + $0x30] sm:$0xff] %vm935, %v925
      %943 = vst.msk [vmem:[#allocation3 + $0x38] sm:$0xff] %vm935, %v926
      %944 = vst.msk [vmem:[#allocation3 + $0x40] sm:$0xff] %vm935, %v927
      %945 = vst.msk [vmem:[#allocation3 + $0x48] sm:$0xff] %vm935, %v928
      %946 = vst.msk [vmem:[#allocation3 + $0x50] sm:$0xff] %vm935, %v929
      %947 = vst.msk [vmem:[#allocation3 + $0x58] sm:$0xff] %vm935, %v930
      %948 = vst.msk [vmem:[#allocation3 + $0x60] sm:$0xff] %vm935, %v931
      %949 = vst.msk [vmem:[#allocation3 + $0x68] sm:$0xff] %vm935, %v932
      %950 = vst.msk [vmem:[#allocation3 + $0x70] sm:$0xff] %vm935, %v933
      %951 = vst.msk [vmem:[#allocation3 + $0x78] sm:$0xff] %vm935, %v934
      %952 = vst.msk [vmem:[#allocation2] sm:$0xff] %vm935, %v663
      %953 = vst.msk [vmem:[#allocation2 + $0x8] sm:$0xff] %vm935, %v664
      %954 = vst.msk [vmem:[#allocation2 + $0x10] sm:$0xff] %vm935, %v665
      %955 = vst.msk [vmem:[#allocation2 + $0x18] sm:$0xff] %vm935, %v666
      %956 = vst.msk [vmem:[#allocation2 + $0x20] sm:$0xff] %vm935, %v667
      %957 = vst.msk [vmem:[#allocation2 + $0x28] sm:$0xff] %vm935, %v668
      %958 = vst.msk [vmem:[#allocation2 + $0x30] sm:$0xff] %vm935, %v669
      %959 = vst.msk [vmem:[#allocation2 + $0x38] sm:$0xff] %vm935, %v670
      %960 = vst.msk [vmem:[#allocation2 + $0x40] sm:$0xff] %vm935, %v671
      %961 = vst.msk [vmem:[#allocation2 + $0x48] sm:$0xff] %vm935, %v672
      %962 = vst.msk [vmem:[#allocation2 + $0x50] sm:$0xff] %vm935, %v673
      %963 = vst.msk [vmem:[#allocation2 + $0x58] sm:$0xff] %vm935, %v674
      %964 = vst.msk [vmem:[#allocation2 + $0x60] sm:$0xff] %vm935, %v675
      %965 = vst.msk [vmem:[#allocation2 + $0x68] sm:$0xff] %vm935, %v676
      %966 = vst.msk [vmem:[#allocation2 + $0x70] sm:$0xff] %vm935, %v677
      %967 = vst.msk [vmem:[#allocation2 + $0x78] sm:$0xff] %vm935, %v678
      %p968 = scmp.eq.s32.totalorder %s18, 1
      // Predicated region
      $region41: #{tpu_custom_call.1} parent=27 // pred_check
        %p969 = pneg %p968
      $region42: #{tpu_custom_call.1} parent=27 // pred_check_branch
        %971 = sbr.rel (%p969) target = $region44
      $region43: #{tpu_custom_call.1} parent=27 // pred_region
        %v972 = vld [vmem:[#allocation2] sm:$0xff]
        %v973 = vld [vmem:[#allocation2 + $0x8] sm:$0xff]
        %v974 = vld [vmem:[#allocation2 + $0x10] sm:$0xff]
        %v975 = vld [vmem:[#allocation2 + $0x18] sm:$0xff]
        %v976 = vld [vmem:[#allocation2 + $0x20] sm:$0xff]
        %v977 = vld [vmem:[#allocation2 + $0x28] sm:$0xff]
        %v978 = vld [vmem:[#allocation2 + $0x30] sm:$0xff]
        %v979 = vld [vmem:[#allocation2 + $0x38] sm:$0xff]
        %v980 = vld [vmem:[#allocation2 + $0x40] sm:$0xff]
        %v981 = vld [vmem:[#allocation2 + $0x48] sm:$0xff]
        %v982 = vld [vmem:[#allocation2 + $0x50] sm:$0xff]
        %v983 = vld [vmem:[#allocation2 + $0x58] sm:$0xff]
        %v984 = vld [vmem:[#allocation2 + $0x60] sm:$0xff]
        %v985 = vld [vmem:[#allocation2 + $0x68] sm:$0xff]
        %v986 = vld [vmem:[#allocation2 + $0x70] sm:$0xff]
        %v987 = vld [vmem:[#allocation2 + $0x78] sm:$0xff]
        %v988 = vld [vmem:[#allocation3] sm:$0xff]
        %v989 = vld [vmem:[#allocation3 + $0x8] sm:$0xff]
        %v990 = vld [vmem:[#allocation3 + $0x10] sm:$0xff]
        %v991 = vld [vmem:[#allocation3 + $0x18] sm:$0xff]
        %v992 = vld [vmem:[#allocation3 + $0x20] sm:$0xff]
        %v993 = vld [vmem:[#allocation3 + $0x28] sm:$0xff]
        %v994 = vld [vmem:[#allocation3 + $0x30] sm:$0xff]
        %v995 = vld [vmem:[#allocation3 + $0x38] sm:$0xff]
        %v996 = vld [vmem:[#allocation3 + $0x40] sm:$0xff]
        %v997 = vld [vmem:[#allocation3 + $0x48] sm:$0xff]
        %v998 = vld [vmem:[#allocation3 + $0x50] sm:$0xff]
        %v999 = vld [vmem:[#allocation3 + $0x58] sm:$0xff]
        %v1000 = vld [vmem:[#allocation3 + $0x60] sm:$0xff]
        %v1001 = vld [vmem:[#allocation3 + $0x68] sm:$0xff]
        %v1002 = vld [vmem:[#allocation3 + $0x70] sm:$0xff]
        %v1003 = vld [vmem:[#allocation3 + $0x78] sm:$0xff]
        %v1004 = vlog2.pop %v988
        %v1005 = vmul.f32 %v1004, 0.6931472
        %v1006 = vlog2.pop %v989
        %v1007 = vmul.f32 %v1006, 0.6931472
        %v1008 = vlog2.pop %v990
        %v1009 = vmul.f32 %v1008, 0.6931472
        %v1010 = vlog2.pop %v991
        %v1011 = vmul.f32 %v1010, 0.6931472
        %v1012 = vlog2.pop %v992
        %v1013 = vmul.f32 %v1012, 0.6931472
        %v1014 = vlog2.pop %v993
        %v1015 = vmul.f32 %v1014, 0.6931472
        %v1016 = vlog2.pop %v994
        %v1017 = vmul.f32 %v1016, 0.6931472
        %v1018 = vlog2.pop %v995
        %v1019 = vmul.f32 %v1018, 0.6931472
        %v1020 = vlog2.pop %v996
        %v1021 = vmul.f32 %v1020, 0.6931472
        %v1022 = vlog2.pop %v997
        %v1023 = vmul.f32 %v1022, 0.6931472
        %v1024 = vlog2.pop %v998
        %v1025 = vmul.f32 %v1024, 0.6931472
        %v1026 = vlog2.pop %v999
        %v1027 = vmul.f32 %v1026, 0.6931472
        %v1028 = vlog2.pop %v1000
        %v1029 = vmul.f32 %v1028, 0.6931472
        %v1030 = vlog2.pop %v1001
        %v1031 = vmul.f32 %v1030, 0.6931472
        %v1032 = vlog2.pop %v1002
        %v1033 = vmul.f32 %v1032, 0.6931472
        %v1034 = vlog2.pop %v1003
        %v1035 = vmul.f32 %v1034, 0.6931472
        %v1036 = vadd.f32 %v972, %v1005
        %v1037 = vadd.f32 %v973, %v1007
        %v1038 = vadd.f32 %v974, %v1009
        %v1039 = vadd.f32 %v975, %v1011
        %v1040 = vadd.f32 %v976, %v1013
        %v1041 = vadd.f32 %v977, %v1015
        %v1042 = vadd.f32 %v978, %v1017
        %v1043 = vadd.f32 %v979, %v1019
        %v1044 = vadd.f32 %v980, %v1021
        %v1045 = vadd.f32 %v981, %v1023
        %v1046 = vadd.f32 %v982, %v1025
        %v1047 = vadd.f32 %v983, %v1027
        %v1048 = vadd.f32 %v984, %v1029
        %v1049 = vadd.f32 %v985, %v1031
        %v1050 = vadd.f32 %v986, %v1033
        %v1051 = vadd.f32 %v987, %v1035
        %1052 = vst.msk [vmem:[%s179] sm:$0xff] %vm935, %v1036
        %1053 = vst.msk [vmem:[%s179 + $0x8] sm:$0xff] %vm935, %v1037
        %1054 = vst.msk [vmem:[%s179 + $0x10] sm:$0xff] %vm935, %v1038
        %1055 = vst.msk [vmem:[%s179 + $0x18] sm:$0xff] %vm935, %v1039
        %1056 = vst.msk [vmem:[%s179 + $0x20] sm:$0xff] %vm935, %v1040
        %1057 = vst.msk [vmem:[%s179 + $0x28] sm:$0xff] %vm935, %v1041
        %1058 = vst.msk [vmem:[%s179 + $0x30] sm:$0xff] %vm935, %v1042
        %1059 = vst.msk [vmem:[%s179 + $0x38] sm:$0xff] %vm935, %v1043
        %1060 = vst.msk [vmem:[%s179 + $0x40] sm:$0xff] %vm935, %v1044
        %1061 = vst.msk [vmem:[%s179 + $0x48] sm:$0xff] %vm935, %v1045
        %1062 = vst.msk [vmem:[%s179 + $0x50] sm:$0xff] %vm935, %v1046
        %1063 = vst.msk [vmem:[%s179 + $0x58] sm:$0xff] %vm935, %v1047
        %1064 = vst.msk [vmem:[%s179 + $0x60] sm:$0xff] %vm935, %v1048
        %1065 = vst.msk [vmem:[%s179 + $0x68] sm:$0xff] %vm935, %v1049
        %1066 = vst.msk [vmem:[%s179 + $0x70] sm:$0xff] %vm935, %v1050
        %1067 = vst.msk [vmem:[%s179 + $0x78] sm:$0xff] %vm935, %v1051
      $region44: #{tpu_custom_call.1} parent=27 // pred_fallthru
        _
      %s1068 = smul.u32 16, %s17
      %p1069 = scmp.lt.s32.totalorder %s1068, 31
      %s1070 = scalar_select %p1069, %s1068, 31
      %s1071 = smul.addr %s1070, 8
      %s1072 = scalar_lea.vmem %s2, %s1071
      // Predicated region
      $region45: #{tpu_custom_call.1} parent=27 // pred_check
        %p1073 = pneg %p95
      $region46: #{tpu_custom_call.1} parent=27 // pred_check_branch
        %1075 = sbr.rel (%p1073) target = $region48
      $region47: #{tpu_custom_call.1} parent=27 // pred_region
        %s1076 = smul.u32 16, %s17
      $region48: #{tpu_custom_call.1} parent=27 // pred_fallthru
        _
    $region28: #{tpu_custom_call.1} parent=5 // pred_fallthru
      _
    %p1077 = scmp.le.s32.totalorder 2, %s8
    // Predicated region
    $region49: #{tpu_custom_call.1} parent=5 // pred_check
      %p1078 = pneg %p1077
    $region50: #{tpu_custom_call.1} parent=5 // pred_check_branch
      %1080 = sbr.rel (%p1078) target = $region52
    $region51: #{tpu_custom_call.1} parent=5 // pred_region
      %s1081 = ssub.s32 %s8, 2
      // Predicated region
      $region53: #{tpu_custom_call.1} parent=51 // pred_check
        %p1082 = pneg %p101
      $region54: #{tpu_custom_call.1} parent=51 // pred_check_branch
        %1084 = sbr.rel (%p1082) target = $region56
      $region55: #{tpu_custom_call.1} parent=51 // pred_region
        %s1085 = smul.u32 16, %s19
        %p1086 = scmp.lt.s32.totalorder %s1085, 31
        %s1087 = scalar_select %p1086, %s1085, 31
        %s1088 = smul.addr %s1087, 8
        %s1089 = scalar_lea.vmem %s2, %s1088
      $region56: #{tpu_custom_call.1} parent=51 // pred_fallthru
        _
    $region52: #{tpu_custom_call.1} parent=5 // pred_fallthru
      _
  $region6: #{tpu_custom_call.1} parent=0 // loop_footer
    %s12 = sadd.s32 1, %s8
  $region7: #{tpu_custom_call.1} parent=0 // loop_footer_branch
    %7 = sbr.rel target = $region3
  $region8: #{tpu_custom_call.1} parent=0 // loop_exit
    _

</llo_original>
